<compile_context>
chip_gen: v7x
topology: tpu7x:2x2x1
jax: 0.10.0
libtpu: 0.0.40
codegen_flags: <defaults>
</compile_context>

<pallas_src>
import numpy as np
import jax
import jax.numpy as jnp
from jax.experimental import pallas as pl
from jax.experimental.pallas import tpu as pltpu

DIM = 128       # feature dim (MoCo default 128 -> lane-aligned)
K = 512         # queue size  (MoCo default 65536; small multiple of 128 for demo)
TK_CAP = 4096   # max queue-tile width (lane-dense; VMEM-safe on v5e/v6e/v7x)
M = 0.999       # key-encoder momentum
T = 0.07        # softmax temperature
NEG_IDX = 23.0  # generate_label(neg_idx=23)


def _pick_tk(kk, cap=TK_CAP):
    """Largest 128-multiple divisor of kk not exceeding cap."""
    tk = min(cap, kk)
    tk -= tk % 128
    while tk > 128 and kk % tk:
        tk -= 128
    assert tk >= 128 and kk % tk == 0
    return tk


# ---------------------------------------------------------------------------
# Kernel 1: encoder head (fc + L2 normalize) for q and the shuffled k.
# Single shot (no grid) -- everything fits VMEM trivially at these sizes.
# ---------------------------------------------------------------------------
def _encode_kernel(xq_ref, xk_ref, wq_ref, bq_ref, wk_ref, bk_ref,
                   q_ref, k_ref):
    def _encode(x, w, b):
        feat = jnp.dot(x, w, preferred_element_type=jnp.float32) + b
        # torch F.normalize: x / max(||x||, 1e-12) == x * rsqrt(max(ss, 1e-24))
        inv = jax.lax.rsqrt(
            jnp.maximum(jnp.sum(feat * feat, axis=1, keepdims=True), 1e-24))
        return feat * inv

    q_ref[...] = _encode(xq_ref[...], wq_ref[...], bq_ref[...])
    k_ref[...] = _encode(xk_ref[...], wk_ref[...], bk_ref[...])


def moco_encode(xq, xk_sh, wq, bq, wk, bk):
    n = xq.shape[0]
    d = wq.shape[1]
    return pl.pallas_call(
        _encode_kernel,
        out_shape=(jax.ShapeDtypeStruct((n, d), jnp.float32),   # q
                   jax.ShapeDtypeStruct((n, d), jnp.float32)),  # k (shuffled order)
    )(xq, xk_sh, wq, bq, wk, bk)


# ---------------------------------------------------------------------------
# Kernel 2: streaming contrastive head over the queue.
# Pure stream: bf16 dot (f32 accumulate) -> sigmoid(l_neg / T) -> store.
# Grid over queue tiles; no cross-step carry -> "parallel" semantics.
# ---------------------------------------------------------------------------
def _lneg_kernel(q_ref, queue_ref, out_ref):
    s = jnp.dot(q_ref[...], queue_ref[...],
                preferred_element_type=jnp.float32)        # (N, TK) f32
    out_ref[...] = jax.nn.sigmoid(s * (1.0 / T))


def moco_lneg(q_bf16, queue_bf16, *, tk):
    n, d = q_bf16.shape
    kk = queue_bf16.shape[1]
    assert kk % tk == 0
    return pl.pallas_call(
        _lneg_kernel,
        grid=(kk // tk,),
        in_specs=[
            pl.BlockSpec((n, d), lambda j: (0, 0)),        # q (resident, bf16)
            pl.BlockSpec((d, tk), lambda j: (0, j)),       # queue tile (bf16)
        ],
        out_specs=pl.BlockSpec((n, tk), lambda j: (0, j)), # sigmoid(l_neg / T)
        out_shape=jax.ShapeDtypeStruct((n, kk), jnp.float32),
        compiler_params=pltpu.CompilerParams(
            dimension_semantics=("parallel",)),            # v7x: split across TCs
    )(q_bf16, queue_bf16)


# ---------------------------------------------------------------------------
# Functional MoCo.forward (stateful buffers returned as new values).
# jit-ed with params_k / queue / queue_ptr / label_bank donated.
# ---------------------------------------------------------------------------
def moco_forward(params_q, params_k, queue, queue_ptr, label_bank,
                 im_q, im_k, label, shuffle_rng):
    n = im_q.shape[0]
    kk = queue.shape[1]
    assert kk % n == 0           # same assertion as PyTorch _dequeue_and_enqueue
    tk = _pick_tk(kk)
    wq, bq = params_q
    wk, bk = params_k

    # momentum update of the key encoder (fused elementwise under jit)
    wk = M * wk + (1.0 - M) * wq
    bk = M * bk + (1.0 - M) * bq

    # batch shuffle (DDP, world_size == 1 -> deterministic permutation); the
    # key encoder sees the shuffled batch, the unshuffle is a row gather here.
    idx_shuffle = jax.random.permutation(shuffle_rng, n)
    idx_unshuffle = jnp.argsort(idx_shuffle)
    im_k_sh = jnp.take(im_k, idx_shuffle, axis=0)

    # fused fc + normalize (Pallas kernel 1)
    q, k_sh = moco_encode(im_q.reshape(n, -1), im_k_sh.reshape(n, -1),
                          wq, bq.reshape(1, -1), wk, bk.reshape(1, -1))
    k = jnp.take(k_sh, idx_unshuffle, axis=0)              # batch unshuffle

    # positive logit (tiny, fuses in XLA)
    l_pos = jnp.sum(q * k, axis=1, keepdims=True)          # (N, 1)
    pos_sig = jax.nn.sigmoid(l_pos * (1.0 / T))

    # streaming negatives over the bf16 queue (Pallas kernel 2)
    lneg_sig = moco_lneg(q.astype(jnp.bfloat16), queue, tk=tk)

    # width-(K+1) assembly (kept only to match the module's return signature)
    logits = jnp.concatenate([pos_sig, lneg_sig], axis=1)   # (N, 1+K)

    # generate_label: pure label logic, fused by XLA
    gt_neg = jnp.where((label[:, None] == label_bank[None, :])
                       & (label[:, None] != NEG_IDX), 1.0, 0.0).astype(jnp.float32)
    gt = jnp.concatenate([jnp.ones((n, 1), jnp.float32), gt_neg], axis=1)

    # _dequeue_and_enqueue; queue / label_bank are donated -> in-place update.
    queue = jax.lax.dynamic_update_slice(
        queue, k.T.astype(queue.dtype), (0, queue_ptr))
    label_bank = jax.lax.dynamic_update_slice(label_bank, label, (queue_ptr,))
    queue_ptr = (queue_ptr + n) % kk

    new_state = ((wq, bq), (wk, bk), queue, queue_ptr, label_bank)
    return logits, gt, new_state


moco_step = jax.jit(moco_forward, donate_argnums=(1, 2, 3, 4))


# ---------------------------------------------------------------------------
if __name__ == "__main__":
    key = jax.random.PRNGKey(0)
    kw, kb, kdw, kdb, kq, kimq, kimk, kshuf = jax.random.split(key, 8)

    Nb, C, H, Wd = 8, 3, 16, 16          # im_q / im_k: (N, C, H, W) NCHW
    F = C * H * Wd

    # encoder_q params; encoder_k is a slightly diverged copy so the momentum
    # update path is actually exercised by the reference check.
    w_q = jax.random.normal(kw, (F, DIM), jnp.float32) * 0.02
    b_q = jax.random.normal(kb, (DIM,), jnp.float32) * 0.01
    w_k0 = w_q + jax.random.normal(kdw, (F, DIM), jnp.float32) * 0.01
    b_k0 = b_q + jax.random.normal(kdb, (DIM,), jnp.float32) * 0.01
    params_q = (w_q, b_q)
    params_k = (w_k0, b_k0)

    # queue = normalize(randn(dim, K), dim=0), stored bf16; label_bank = -1; ptr = 0
    queue_f32 = jax.random.normal(kq, (DIM, K), jnp.float32)
    queue_f32 = queue_f32 / jnp.maximum(
        jnp.linalg.norm(queue_f32, axis=0, keepdims=True), 1e-12)
    queue = queue_f32.astype(jnp.bfloat16)
    queue_ptr = jnp.int32(0)
    label_bank = -jnp.ones((K,), jnp.float32)

    im_q = jax.random.normal(kimq, (Nb, C, H, Wd), jnp.float32)
    im_k = jax.random.normal(kimk, (Nb, C, H, Wd), jnp.float32)
    label = jnp.array([0.0, 1.0, 2.0, 23.0, 5.0, 1.0, -1.0, 7.0], jnp.float32)

    # ---- plain-JAX reference, computed BEFORE the step (donated buffers are
    #      invalidated after the jitted call). Shuffle+unshuffle is an exact
    #      identity for this row-wise encoder. ----
    def _norm(x):
        return x / jnp.maximum(jnp.linalg.norm(x, axis=1, keepdims=True), 1e-12)

    wk_new = M * w_k0 + (1.0 - M) * w_q
    bk_new = M * b_k0 + (1.0 - M) * b_q
    q_ref = _norm(im_q.reshape(Nb, -1) @ w_q + b_q)
    k_ref = _norm(im_k.reshape(Nb, -1) @ wk_new + bk_new)
    l_pos_ref = jnp.sum(q_ref * k_ref, axis=1, keepdims=True)
    l_neg_ref = jnp.dot(q_ref.astype(jnp.bfloat16), queue,
                        preferred_element_type=jnp.float32)
    logits_ref = jax.nn.sigmoid(
        jnp.concatenate([l_pos_ref, l_neg_ref], axis=1) / T)
    eq = (label[:, None] == label_bank[None, :]) & (label[:, None] != NEG_IDX)
    gt_ref = jnp.concatenate([jnp.ones((Nb, 1), jnp.float32),
                              eq.astype(jnp.float32)], axis=1)
    queue_exp = queue.at[:, :Nb].set(k_ref.T.astype(jnp.bfloat16))
    bank_exp = label_bank.at[:Nb].set(label)

    # ---- jitted, donated MoCo step ----
    logits, gt, new_state = moco_step(params_q, params_k, queue, queue_ptr,
                                      label_bank, im_q, im_k, label, kshuf)
    (new_pq, new_pk, new_queue, new_ptr, new_bank) = new_state
    jax.block_until_ready((logits, gt, new_queue, new_bank))

    assert logits.shape == (Nb, K + 1) and gt.shape == (Nb, K + 1)
    # bf16 queue streaming -> slightly looser tolerance on the logits path.
    np.testing.assert_allclose(np.asarray(logits), np.asarray(logits_ref),
                               rtol=1e-2, atol=1e-2)
    np.testing.assert_allclose(np.asarray(gt), np.asarray(gt_ref), atol=0)
    np.testing.assert_allclose(np.asarray(new_pk[0]), np.asarray(wk_new),
                               rtol=1e-6, atol=1e-6)
    np.testing.assert_allclose(np.asarray(new_queue.astype(jnp.float32)),
                               np.asarray(queue_exp.astype(jnp.float32)),
                               rtol=0, atol=1e-2)
    np.testing.assert_allclose(np.asarray(new_bank), np.asarray(bank_exp), atol=0)
    assert int(new_ptr) == Nb % K

    print("KERNEL_OK")
</pallas_src>

<mosaic_0001>
module attributes {stable_mosaic.version = 11 : i64} {
  func.func @_encode_kernel(%arg0: memref<8x768xf32, #tpu.memory_space<vmem>>, %arg1: memref<8x768xf32, #tpu.memory_space<vmem>>, %arg2: memref<768x128xf32, #tpu.memory_space<vmem>>, %arg3: memref<1x128xf32, #tpu.memory_space<vmem>>, %arg4: memref<768x128xf32, #tpu.memory_space<vmem>>, %arg5: memref<1x128xf32, #tpu.memory_space<vmem>>, %arg6: memref<8x128xf32, #tpu.memory_space<vmem>>, %arg7: memref<8x128xf32, #tpu.memory_space<vmem>>) attributes {dimension_semantics = [], scalar_prefetch = 0 : i64, scratch_operands = 0 : i64, tpu.core_type = #tpu.core_type<tc>} {
    %c0 = arith.constant 0 : index
    %c0_0 = arith.constant 0 : index
    %0 = vector.load %arg0[%c0, %c0_0] : memref<8x768xf32, #tpu.memory_space<vmem>>, vector<8x768xf32>
    %c0_1 = arith.constant 0 : index
    %c0_2 = arith.constant 0 : index
    %1 = vector.load %arg2[%c0_1, %c0_2] : memref<768x128xf32, #tpu.memory_space<vmem>>, vector<768x128xf32>
    %c0_3 = arith.constant 0 : index
    %c0_4 = arith.constant 0 : index
    %2 = vector.load %arg3[%c0_3, %c0_4] : memref<1x128xf32, #tpu.memory_space<vmem>>, vector<1x128xf32>
    %cst = arith.constant dense<0.000000e+00> : vector<8x128xf32>
    %3 = tpu.matmul %0, %1, %cst {dimension_numbers = #tpu.dot_dimension_numbers<[1], [0], [0], [1], [0, 0, 1, 1], [], []>} : vector<8x768xf32>, vector<768x128xf32>, vector<8x128xf32> -> vector<8x128xf32>
    %4 = vector.broadcast %2 : vector<1x128xf32> to vector<8x128xf32>
    %5 = arith.addf %3, %4 : vector<8x128xf32>
    %6 = arith.mulf %5, %5 : vector<8x128xf32>
    %cst_5 = arith.constant dense<0.000000e+00> : vector<8xf32>
    %7 = vector.multi_reduction <add>, %6, %cst_5 [1] : vector<8x128xf32> to vector<8xf32>
    %8 = vector.shape_cast %7 : vector<8xf32> to vector<8x1xf32>
    %cst_6 = arith.constant 1.000000e-24 : f32
    %9 = vector.broadcast %cst_6 : f32 to vector<8x1xf32>
    %10 = arith.maximumf %8, %9 : vector<8x1xf32>
    %11 = math.rsqrt %10 : vector<8x1xf32>
    %12 = vector.broadcast %11 : vector<8x1xf32> to vector<8x128xf32>
    %13 = arith.mulf %5, %12 : vector<8x128xf32>
    %c0_7 = arith.constant 0 : index
    %c0_8 = arith.constant 0 : index
    %14 = vector.load %arg6[%c0_7, %c0_8] : memref<8x128xf32, #tpu.memory_space<vmem>>, vector<8x128xf32>
    tpu.vector_store %arg6[%c0_7, %c0_8], %13 {strides = array<i32>} : memref<8x128xf32, #tpu.memory_space<vmem>>, vector<8x128xf32>,
    %c0_9 = arith.constant 0 : index
    %c0_10 = arith.constant 0 : index
    %15 = vector.load %arg1[%c0_9, %c0_10] : memref<8x768xf32, #tpu.memory_space<vmem>>, vector<8x768xf32>
    %c0_11 = arith.constant 0 : index
    %c0_12 = arith.constant 0 : index
    %16 = vector.load %arg4[%c0_11, %c0_12] : memref<768x128xf32, #tpu.memory_space<vmem>>, vector<768x128xf32>
    %c0_13 = arith.constant 0 : index
    %c0_14 = arith.constant 0 : index
    %17 = vector.load %arg5[%c0_13, %c0_14] : memref<1x128xf32, #tpu.memory_space<vmem>>, vector<1x128xf32>
    %cst_15 = arith.constant dense<0.000000e+00> : vector<8x128xf32>
    %18 = tpu.matmul %15, %16, %cst_15 {dimension_numbers = #tpu.dot_dimension_numbers<[1], [0], [0], [1], [0, 0, 1, 1], [], []>} : vector<8x768xf32>, vector<768x128xf32>, vector<8x128xf32> -> vector<8x128xf32>
    %19 = vector.broadcast %17 : vector<1x128xf32> to vector<8x128xf32>
    %20 = arith.addf %18, %19 : vector<8x128xf32>
    %21 = arith.mulf %20, %20 : vector<8x128xf32>
    %cst_16 = arith.constant dense<0.000000e+00> : vector<8xf32>
    %22 = vector.multi_reduction <add>, %21, %cst_16 [1] : vector<8x128xf32> to vector<8xf32>
    %23 = vector.shape_cast %22 : vector<8xf32> to vector<8x1xf32>
    %cst_17 = arith.constant 1.000000e-24 : f32
    %24 = vector.broadcast %cst_17 : f32 to vector<8x1xf32>
    %25 = arith.maximumf %23, %24 : vector<8x1xf32>
    %26 = math.rsqrt %25 : vector<8x1xf32>
    %27 = vector.broadcast %26 : vector<8x1xf32> to vector<8x128xf32>
    %28 = arith.mulf %20, %27 : vector<8x128xf32>
    %c0_18 = arith.constant 0 : index
    %c0_19 = arith.constant 0 : index
    %29 = vector.load %arg7[%c0_18, %c0_19] : memref<8x128xf32, #tpu.memory_space<vmem>>, vector<8x128xf32>
    tpu.vector_store %arg7[%c0_18, %c0_19], %28 {strides = array<i32>} : memref<8x128xf32, #tpu.memory_space<vmem>>, vector<8x128xf32>,
    return
  }
}

module attributes {stable_mosaic.version = 11 : i64} {
  func.func @_lneg_kernel(%arg0: i32, %arg1: memref<8x128xbf16, #tpu.memory_space<vmem>>, %arg2: memref<128x512xbf16, #tpu.memory_space<vmem>>, %arg3: memref<8x512xf32, #tpu.memory_space<vmem>>) attributes {dimension_semantics = [#tpu.dimension_semantics<parallel>], iteration_bounds = array<i64: 1>, scalar_prefetch = 0 : i64, scratch_operands = 0 : i64, tpu.core_type = #tpu.core_type<tc>, window_params = [{pipeline_mode = #tpu.pipeline_mode<synchronous>, transform_indices = @transform_0, window_bounds = array<i64: 8, 128>}, {transform_indices = @transform_1, window_bounds = array<i64: 128, 512>}, {transform_indices = @transform_2, window_bounds = array<i64: 8, 512>}]} {
    %c0 = arith.constant 0 : index
    %c0_0 = arith.constant 0 : index
    %0 = vector.load %arg1[%c0, %c0_0] : memref<8x128xbf16, #tpu.memory_space<vmem>>, vector<8x128xbf16>
    %c0_1 = arith.constant 0 : index
    %c0_2 = arith.constant 0 : index
    %1 = vector.load %arg2[%c0_1, %c0_2] : memref<128x512xbf16, #tpu.memory_space<vmem>>, vector<128x512xbf16>
    %cst = arith.constant dense<0.000000e+00> : vector<8x512xf32>
    %2 = tpu.matmul %0, %1, %cst {dimension_numbers = #tpu.dot_dimension_numbers<[1], [0], [0], [1], [0, 0, 1, 1], [], []>} : vector<8x128xbf16>, vector<128x512xbf16>, vector<8x512xf32> -> vector<8x512xf32>
    %cst_3 = arith.constant 14.2857141 : f32
    %3 = vector.broadcast %cst_3 : f32 to vector<8x512xf32>
    %4 = arith.mulf %2, %3 : vector<8x512xf32>
    %5 = arith.negf %4 : vector<8x512xf32>
    %6 = math.exp %5 : vector<8x512xf32>
    %cst_4 = arith.constant 1.000000e+00 : f32
    %7 = vector.broadcast %cst_4 : f32 to vector<8x512xf32>
    %8 = arith.addf %7, %6 : vector<8x512xf32>
    %9 = arith.divf %7, %8 : vector<8x512xf32>
    %c0_5 = arith.constant 0 : index
    %c0_6 = arith.constant 0 : index
    %10 = vector.load %arg3[%c0_5, %c0_6] : memref<8x512xf32, #tpu.memory_space<vmem>>, vector<8x512xf32>
    tpu.vector_store %arg3[%c0_5, %c0_6], %9 {strides = array<i32>} : memref<8x512xf32, #tpu.memory_space<vmem>>, vector<8x512xf32>,
    return
  }
  func.func @transform_0(%arg0: i32) -> (i32, i32) {
    %c0_i32 = arith.constant 0 : i32
    %c0_i32_0 = arith.constant 0 : i32
    %c0_i32_1 = arith.constant 0 : i32
    return %c0_i32, %c0_i32_0 : i32, i32
  }
  func.func @transform_1(%arg0: i32) -> (i32, i32) {
    %c0_i32 = arith.constant 0 : i32
    %c0_i32_0 = arith.constant 0 : i32
    return %c0_i32, %arg0 : i32, i32
  }
  func.func @transform_2(%arg0: i32) -> (i32, i32) {
    %c0_i32 = arith.constant 0 : i32
    %c0_i32_0 = arith.constant 0 : i32
    return %c0_i32, %arg0 : i32, i32
  }
}

</mosaic_0001>

<llo_original>
// kernel: moco_forward.3
$region0: #{moco_forward.3}
  #allocation0 [shape = 'u32[]', space=smem, size = 0x4, offset = 0x4, fixed_abs, tag = 'smem constant byte address 0x4 - core index']
  #allocation1 [shape = 'u32[144,128]{1,0:T(1,128)}', space=vmem, size = 0x12000, scoped, tag = 'internal scratch']
  %s0 = inlined_call_operand.vmem [shape: bf16[8,128], index: 0, kind: input, shape index: {}]
  %s1 = inlined_call_operand.vmem [shape: bf16[128,512], index: 1, kind: input, shape index: {}]
  %s2 = inlined_call_operand.vmem [shape: f32[8,512], index: 2, kind: output, shape index: {}]
  %s3 = sld [smem:[#allocation0]]
  $region18: #{moco_forward.3} parent=0
    _
  %s5 = ssub.s32 1, %s3
  %s6 = scalar_select 0, %s5, %s3
  // Predicated region
  $region2: #{moco_forward.3} parent=0 // pred_check
    _
  $region3: #{moco_forward.3} parent=0 // pred_check_branch
    %8 = sbr.rel (0) target = $region5
  $region4: #{moco_forward.3} parent=0 // pred_region
    _
  $region5: #{moco_forward.3} parent=0 // pred_fallthru
    _
  // Predicated region
  $region6: #{moco_forward.3} parent=0 // pred_check
    _
  $region7: #{moco_forward.3} parent=0 // pred_check_branch
    %10 = sbr.rel (0) target = $region9
  $region8: #{moco_forward.3} parent=0 // pred_region
    _
  $region9: #{moco_forward.3} parent=0 // pred_fallthru
    _
  %v12 = vld [vmem:[%s0] sm:$0xf]
  %v13 = vld [vmem:[%s1] sm:$0xff]
  %v14 = vld [vmem:[%s1 + $0x8] sm:$0xff]
  %v15 = vld [vmem:[%s1 + $0x10] sm:$0xff]
  %v16 = vld [vmem:[%s1 + $0x18] sm:$0xff]
  %v17 = vld [vmem:[%s1 + $0x20] sm:$0xff]
  %v18 = vld [vmem:[%s1 + $0x28] sm:$0xff]
  %v19 = vld [vmem:[%s1 + $0x30] sm:$0xff]
  %v20 = vld [vmem:[%s1 + $0x38] sm:$0xff]
  %v21 = vld [vmem:[%s1 + $0x40] sm:$0xff]
  %v22 = vld [vmem:[%s1 + $0x48] sm:$0xff]
  %v23 = vld [vmem:[%s1 + $0x50] sm:$0xff]
  %v24 = vld [vmem:[%s1 + $0x58] sm:$0xff]
  %v25 = vld [vmem:[%s1 + $0x60] sm:$0xff]
  %v26 = vld [vmem:[%s1 + $0x68] sm:$0xff]
  %v27 = vld [vmem:[%s1 + $0x70] sm:$0xff]
  %v28 = vld [vmem:[%s1 + $0x78] sm:$0xff]
  %v29 = vld [vmem:[%s1 + $0x80] sm:$0xff]
  %v30 = vld [vmem:[%s1 + $0x88] sm:$0xff]
  %v31 = vld [vmem:[%s1 + $0x90] sm:$0xff]
  %v32 = vld [vmem:[%s1 + $0x98] sm:$0xff]
  %v33 = vld [vmem:[%s1 + $0xa0] sm:$0xff]
  %v34 = vld [vmem:[%s1 + $0xa8] sm:$0xff]
  %v35 = vld [vmem:[%s1 + $0xb0] sm:$0xff]
  %v36 = vld [vmem:[%s1 + $0xb8] sm:$0xff]
  %v37 = vld [vmem:[%s1 + $0xc0] sm:$0xff]
  %v38 = vld [vmem:[%s1 + $0xc8] sm:$0xff]
  %v39 = vld [vmem:[%s1 + $0xd0] sm:$0xff]
  %v40 = vld [vmem:[%s1 + $0xd8] sm:$0xff]
  %v41 = vld [vmem:[%s1 + $0xe0] sm:$0xff]
  %v42 = vld [vmem:[%s1 + $0xe8] sm:$0xff]
  %v43 = vld [vmem:[%s1 + $0xf0] sm:$0xff]
  %v44 = vld [vmem:[%s1 + $0xf8] sm:$0xff]
  %v77 = vunpack.c.l.b16 %v13
  %v78 = vunpack.c.h.b16 %v13
  %v79 = vunpack.c.l.b16 %v14
  %v80 = vunpack.c.h.b16 %v14
  %v81 = vunpack.c.l.b16 %v15
  %v82 = vunpack.c.h.b16 %v15
  %v83 = vunpack.c.l.b16 %v16
  %v84 = vunpack.c.h.b16 %v16
  %v85 = vunpack.c.l.b16 %v17
  %v86 = vunpack.c.h.b16 %v17
  %v87 = vunpack.c.l.b16 %v18
  %v88 = vunpack.c.h.b16 %v18
  %v89 = vunpack.c.l.b16 %v19
  %v90 = vunpack.c.h.b16 %v19
  %v91 = vunpack.c.l.b16 %v20
  %v92 = vunpack.c.h.b16 %v20
  %v93 = vunpack.c.l.b16 %v21
  %v94 = vunpack.c.h.b16 %v21
  %v95 = vunpack.c.l.b16 %v22
  %v96 = vunpack.c.h.b16 %v22
  %v97 = vunpack.c.l.b16 %v23
  %v98 = vunpack.c.h.b16 %v23
  %v99 = vunpack.c.l.b16 %v24
  %v100 = vunpack.c.h.b16 %v24
  %v101 = vunpack.c.l.b16 %v25
  %v102 = vunpack.c.h.b16 %v25
  %v103 = vunpack.c.l.b16 %v26
  %v104 = vunpack.c.h.b16 %v26
  %v105 = vunpack.c.l.b16 %v27
  %v106 = vunpack.c.h.b16 %v27
  %v107 = vunpack.c.l.b16 %v28
  %v108 = vunpack.c.h.b16 %v28
  %v109 = vunpack.c.l.b16 %v29
  %v110 = vunpack.c.h.b16 %v29
  %v111 = vunpack.c.l.b16 %v30
  %v112 = vunpack.c.h.b16 %v30
  %v113 = vunpack.c.l.b16 %v31
  %v114 = vunpack.c.h.b16 %v31
  %v115 = vunpack.c.l.b16 %v32
  %v116 = vunpack.c.h.b16 %v32
  %v117 = vunpack.c.l.b16 %v33
  %v118 = vunpack.c.h.b16 %v33
  %v119 = vunpack.c.l.b16 %v34
  %v120 = vunpack.c.h.b16 %v34
  %v121 = vunpack.c.l.b16 %v35
  %v122 = vunpack.c.h.b16 %v35
  %v123 = vunpack.c.l.b16 %v36
  %v124 = vunpack.c.h.b16 %v36
  %v125 = vunpack.c.l.b16 %v37
  %v126 = vunpack.c.h.b16 %v37
  %v127 = vunpack.c.l.b16 %v38
  %v128 = vunpack.c.h.b16 %v38
  %v129 = vunpack.c.l.b16 %v39
  %v130 = vunpack.c.h.b16 %v39
  %v131 = vunpack.c.l.b16 %v40
  %v132 = vunpack.c.h.b16 %v40
  %v133 = vunpack.c.l.b16 %v41
  %v134 = vunpack.c.h.b16 %v41
  %v135 = vunpack.c.l.b16 %v42
  %v136 = vunpack.c.h.b16 %v42
  %v137 = vunpack.c.l.b16 %v43
  %v138 = vunpack.c.h.b16 %v43
  %v139 = vunpack.c.l.b16 %v44
  %v140 = vunpack.c.h.b16 %v44
  %v141 = vpack.c.b16 %v81, %v77
  %v142 = vpack.c.b16 %v82, %v78
  %v143 = vpack.c.b16 %v83, %v79
  %v144 = vpack.c.b16 %v84, %v80
  %v145 = vpack.c.b16 %v89, %v85
  %v146 = vpack.c.b16 %v90, %v86
  %v147 = vpack.c.b16 %v91, %v87
  %v148 = vpack.c.b16 %v92, %v88
  %v149 = vpack.c.b16 %v97, %v93
  %v150 = vpack.c.b16 %v98, %v94
  %v151 = vpack.c.b16 %v99, %v95
  %v152 = vpack.c.b16 %v100, %v96
  %v153 = vpack.c.b16 %v105, %v101
  %v154 = vpack.c.b16 %v106, %v102
  %v155 = vpack.c.b16 %v107, %v103
  %v156 = vpack.c.b16 %v108, %v104
  %v157 = vpack.c.b16 %v113, %v109
  %v158 = vpack.c.b16 %v114, %v110
  %v159 = vpack.c.b16 %v115, %v111
  %v160 = vpack.c.b16 %v116, %v112
  %v161 = vpack.c.b16 %v121, %v117
  %v162 = vpack.c.b16 %v122, %v118
  %v163 = vpack.c.b16 %v123, %v119
  %v164 = vpack.c.b16 %v124, %v120
  %v165 = vpack.c.b16 %v129, %v125
  %v166 = vpack.c.b16 %v130, %v126
  %v167 = vpack.c.b16 %v131, %v127
  %v168 = vpack.c.b16 %v132, %v128
  %v169 = vpack.c.b16 %v137, %v133
  %v170 = vpack.c.b16 %v138, %v134
  %v171 = vpack.c.b16 %v139, %v135
  %v172 = vpack.c.b16 %v140, %v136
  %205 = vmatprep.subr.bf16.mxu0 %v142
  %206 = vmatpush1.bf16.msra.mxu0 %v141
  %207 = vmatprep.subr.bf16.mxu0 %v146
  %208 = vmatpush1.bf16.msra.mxu0 %v145
  %209 = vmatprep.subr.bf16.mxu0 %v150
  %210 = vmatpush1.bf16.msra.mxu0 %v149
  %211 = vmatprep.subr.bf16.mxu0 %v154
  %212 = vmatpush1.bf16.msra.mxu0 %v153
  %213 = vmatprep.subr.bf16.mxu0 %v158
  %214 = vmatpush1.bf16.msra.mxu0 %v157
  %215 = vmatprep.subr.bf16.mxu0 %v162
  %216 = vmatpush1.bf16.msra.mxu0 %v161
  %217 = vmatprep.subr.bf16.mxu0 %v166
  %218 = vmatpush1.bf16.msra.mxu0 %v165
  %219 = vmatprep.subr.bf16.mxu0 %v170
  %220 = vmatpush1.bf16.msra.mxu0 %v169
  %221 = vmatprep.subr.bf16.mxu0 0
  %222 = vmatpush1.bf16.msra.mxu0 0
  %223 = vmatprep.subr.bf16.mxu0 0
  %224 = vmatpush1.bf16.msra.mxu0 0
  %225 = vmatprep.subr.bf16.mxu0 0
  %226 = vmatpush1.bf16.msra.mxu0 0
  %227 = vmatprep.subr.bf16.mxu0 0
  %228 = vmatpush1.bf16.msra.mxu0 0
  %229 = vmatprep.subr.bf16.mxu0 0
  %230 = vmatpush1.bf16.msra.mxu0 0
  %231 = vmatprep.subr.bf16.mxu0 0
  %232 = vmatpush1.bf16.msra.mxu0 0
  %233 = vmatprep.subr.bf16.mxu0 0
  %234 = vmatpush1.bf16.msra.mxu0 0
  %235 = vmatprep.subr.bf16.mxu0 0
  %236 = vmatpush1.bf16.msra.mxu0 0
  %237 = vmatprep.mubr.bf16.mxu0 0
  %238 = vmatmul.mubr.bf16.gmra.mrb[0].mxu0 %v12
  %v239 = vpop.f32.mrb[0].mxu0
  %v240 = vadd.f32 0.0, %v239
  %v241 = vpop.f32.mrb[0].mxu0
  %v242 = vadd.f32 0.0, %v241
  %v243 = vpop.f32.mrb[0].mxu0
  %v244 = vpop.f32.mrb[0].mxu0
  %245 = vdwg.mxu0
  %246 = vmatprep.subr.bf16.mxu0 %v144
  %247 = vmatpush1.bf16.msra.mxu0 %v143
  %248 = vmatprep.subr.bf16.mxu0 %v148
  %249 = vmatpush1.bf16.msra.mxu0 %v147
  %250 = vmatprep.subr.bf16.mxu0 %v152
  %251 = vmatpush1.bf16.msra.mxu0 %v151
  %252 = vmatprep.subr.bf16.mxu0 %v156
  %253 = vmatpush1.bf16.msra.mxu0 %v155
  %254 = vmatprep.subr.bf16.mxu0 %v160
  %255 = vmatpush1.bf16.msra.mxu0 %v159
  %256 = vmatprep.subr.bf16.mxu0 %v164
  %257 = vmatpush1.bf16.msra.mxu0 %v163
  %258 = vmatprep.subr.bf16.mxu0 %v168
  %259 = vmatpush1.bf16.msra.mxu0 %v167
  %260 = vmatprep.subr.bf16.mxu0 %v172
  %261 = vmatpush1.bf16.msra.mxu0 %v171
  %262 = vmatprep.subr.bf16.mxu0 0
  %263 = vmatpush1.bf16.msra.mxu0 0
  %264 = vmatprep.subr.bf16.mxu0 0
  %265 = vmatpush1.bf16.msra.mxu0 0
  %266 = vmatprep.subr.bf16.mxu0 0
  %267 = vmatpush1.bf16.msra.mxu0 0
  %268 = vmatprep.subr.bf16.mxu0 0
  %269 = vmatpush1.bf16.msra.mxu0 0
  %270 = vmatprep.subr.bf16.mxu0 0
  %271 = vmatpush1.bf16.msra.mxu0 0
  %272 = vmatprep.subr.bf16.mxu0 0
  %273 = vmatpush1.bf16.msra.mxu0 0
  %274 = vmatprep.subr.bf16.mxu0 0
  %275 = vmatpush1.bf16.msra.mxu0 0
  %276 = vmatprep.subr.bf16.mxu0 0
  %277 = vmatpush1.bf16.msra.mxu0 0
  %278 = vmatprep.mubr.bf16.mxu0 0
  %279 = vmatmul.mubr.bf16.gmra.mrb[0].mxu0 %v12
  %v280 = vpop.f32.mrb[0].mxu0
  %v281 = vadd.f32 0.0, %v280
  %v282 = vpop.f32.mrb[0].mxu0
  %v283 = vadd.f32 0.0, %v282
  %v284 = vpop.f32.mrb[0].mxu0
  %v285 = vpop.f32.mrb[0].mxu0
  %286 = vdwg.mxu0
  %v287 = vmul.f32 %v240, 14.285714
  %v288 = vmul.f32 %v242, 14.285714
  %v289 = vmul.f32 %v281, 14.285714
  %v290 = vmul.f32 %v283, 14.285714
  %v291 = vxor.u32 %v287, 2147483648
  %v292 = vxor.u32 %v288, 2147483648
  %v293 = vxor.u32 %v289, 2147483648
  %v294 = vxor.u32 %v290, 2147483648
  %v295 = vmul.f32 %v291, 1.442695
  %v296 = vpow.pop %v295
  %v297 = vmul.f32 %v292, 1.442695
  %v298 = vpow.pop %v297
  %v299 = vmul.f32 %v293, 1.442695
  %v300 = vpow.pop %v299
  %v301 = vmul.f32 %v294, 1.442695
  %v302 = vpow.pop %v301
  %v303 = vadd.f32 %v296, 1.0
  %v304 = vadd.f32 %v298, 1.0
  %v305 = vadd.f32 %v300, 1.0
  %v306 = vadd.f32 %v302, 1.0
  %v307 = vrcp.pop %v303
  %v308 = vmul.f32 1.0, %v307
  %v309 = vrcp.pop %v304
  %v310 = vmul.f32 1.0, %v309
  %v311 = vrcp.pop %v305
  %v312 = vmul.f32 1.0, %v311
  %v313 = vrcp.pop %v306
  %v314 = vmul.f32 1.0, %v313
  %315 = vst [vmem:[%s2] sm:$0xff] %v308
  %316 = vst [vmem:[%s2 + $0x8] sm:$0xff] %v310
  %317 = vst [vmem:[%s2 + $0x10] sm:$0xff] %v312
  %318 = vst [vmem:[%s2 + $0x18] sm:$0xff] %v314
  // Predicated region
  $region10: #{moco_forward.3} parent=0 // pred_check
    _
  $region11: #{moco_forward.3} parent=0 // pred_check_branch
    %320 = sbr.rel (0) target = $region13
  $region12: #{moco_forward.3} parent=0 // pred_region
    _
  $region13: #{moco_forward.3} parent=0 // pred_fallthru
    _
  // Predicated region
  $region14: #{moco_forward.3} parent=0 // pred_check
    _
  $region15: #{moco_forward.3} parent=0 // pred_check_branch
    %322 = sbr.rel (0) target = $region17
  $region16: #{moco_forward.3} parent=0 // pred_region
    _
  $region17: #{moco_forward.3} parent=0 // pred_fallthru
    _

// kernel: moco_forward.2
$region0: #{moco_forward.2}
  #allocation0 [shape = 'u32[]', space=smem, size = 0x4, offset = 0x4, fixed_abs, tag = 'smem constant byte address 0x4 - core index']
  #allocation1 [shape = 'u32[144,128]{1,0:T(1,128)}', space=vmem, size = 0x12000, scoped, tag = 'internal scratch']
  %s0 = inlined_call_operand.vmem [shape: f32[8,768], index: 0, kind: input, shape index: {}]
  %s1 = inlined_call_operand.vmem [shape: f32[8,768], index: 1, kind: input, shape index: {}]
  %s2 = inlined_call_operand.vmem [shape: f32[768,128], index: 2, kind: input, shape index: {}]
  %s3 = inlined_call_operand.vmem [shape: f32[1,128], index: 3, kind: input, shape index: {}]
  %s4 = inlined_call_operand.vmem [shape: f32[768,128], index: 4, kind: input, shape index: {}]
  %s5 = inlined_call_operand.vmem [shape: f32[1,128], index: 5, kind: input, shape index: {}]
  %s6 = inlined_call_operand.vmem [shape: f32[8,128], index: 6, kind: output, shape index: {0}]
  %s7 = inlined_call_operand.vmem [shape: f32[8,128], index: 7, kind: output, shape index: {1}]
  %8 = xla_tuple %s6, %s7
  %s9 = sld [smem:[#allocation0]]
  $region42: #{moco_forward.2} parent=0
    _
  %s11 = ssub.s32 1, %s9
  %s12 = scalar_select 0, %s11, %s9
  // Predicated region
  $region2: #{moco_forward.2} parent=0 // pred_check
    _
  $region3: #{moco_forward.2} parent=0 // pred_check_branch
    %14 = sbr.rel (0) target = $region5
  $region4: #{moco_forward.2} parent=0 // pred_region
    _
  $region5: #{moco_forward.2} parent=0 // pred_fallthru
    _
  // Predicated region
  $region6: #{moco_forward.2} parent=0 // pred_check
    _
  $region7: #{moco_forward.2} parent=0 // pred_check_branch
    %16 = sbr.rel (0) target = $region9
  $region8: #{moco_forward.2} parent=0 // pred_region
    _
  $region9: #{moco_forward.2} parent=0 // pred_fallthru
    _
  // Predicated region
  $region10: #{moco_forward.2} parent=0 // pred_check
    _
  $region11: #{moco_forward.2} parent=0 // pred_check_branch
    %18 = sbr.rel (0) target = $region13
  $region12: #{moco_forward.2} parent=0 // pred_region
    _
  $region13: #{moco_forward.2} parent=0 // pred_fallthru
    _
  // Predicated region
  $region14: #{moco_forward.2} parent=0 // pred_check
    _
  $region15: #{moco_forward.2} parent=0 // pred_check_branch
    %20 = sbr.rel (0) target = $region17
  $region16: #{moco_forward.2} parent=0 // pred_region
    _
  $region17: #{moco_forward.2} parent=0 // pred_fallthru
    _
  // Predicated region
  $region18: #{moco_forward.2} parent=0 // pred_check
    _
  $region19: #{moco_forward.2} parent=0 // pred_check_branch
    %22 = sbr.rel (0) target = $region21
  $region20: #{moco_forward.2} parent=0 // pred_region
    _
  $region21: #{moco_forward.2} parent=0 // pred_fallthru
    _
  // Predicated region
  $region22: #{moco_forward.2} parent=0 // pred_check
    _
  $region23: #{moco_forward.2} parent=0 // pred_check_branch
    %24 = sbr.rel (0) target = $region25
  $region24: #{moco_forward.2} parent=0 // pred_region
    _
  $region25: #{moco_forward.2} parent=0 // pred_fallthru
    _
  %v25 = vld [vmem:[%s0] sm:$0xff]
  %v26 = vld [vmem:[%s0 + $0x8] sm:$0xff]
  %v27 = vld [vmem:[%s0 + $0x10] sm:$0xff]
  %v28 = vld [vmem:[%s0 + $0x18] sm:$0xff]
  %v29 = vld [vmem:[%s0 + $0x20] sm:$0xff]
  %v30 = vld [vmem:[%s0 + $0x28] sm:$0xff]
  %v31 = vld [vmem:[%s2] sm:$0xff]
  %v32 = vld [vmem:[%s2 + $0x8] sm:$0xff]
  %v33 = vld [vmem:[%s2 + $0x10] sm:$0xff]
  %v34 = vld [vmem:[%s2 + $0x18] sm:$0xff]
  %v35 = vld [vmem:[%s2 + $0x20] sm:$0xff]
  %v36 = vld [vmem:[%s2 + $0x28] sm:$0xff]
  %v37 = vld [vmem:[%s2 + $0x30] sm:$0xff]
  %v38 = vld [vmem:[%s2 + $0x38] sm:$0xff]
  %v39 = vld [vmem:[%s2 + $0x40] sm:$0xff]
  %v40 = vld [vmem:[%s2 + $0x48] sm:$0xff]
  %v41 = vld [vmem:[%s2 + $0x50] sm:$0xff]
  %v42 = vld [vmem:[%s2 + $0x58] sm:$0xff]
  %v43 = vld [vmem:[%s2 + $0x60] sm:$0xff]
  %v44 = vld [vmem:[%s2 + $0x68] sm:$0xff]
  %v45 = vld [vmem:[%s2 + $0x70] sm:$0xff]
  %v46 = vld [vmem:[%s2 + $0x78] sm:$0xff]
  %v47 = vld [vmem:[%s2 + $0x80] sm:$0xff]
  %v48 = vld [vmem:[%s2 + $0x88] sm:$0xff]
  %v49 = vld [vmem:[%s2 + $0x90] sm:$0xff]
  %v50 = vld [vmem:[%s2 + $0x98] sm:$0xff]
  %v51 = vld [vmem:[%s2 + $0xa0] sm:$0xff]
  %v52 = vld [vmem:[%s2 + $0xa8] sm:$0xff]
  %v53 = vld [vmem:[%s2 + $0xb0] sm:$0xff]
  %v54 = vld [vmem:[%s2 + $0xb8] sm:$0xff]
  %v55 = vld [vmem:[%s2 + $0xc0] sm:$0xff]
  %v56 = vld [vmem:[%s2 + $0xc8] sm:$0xff]
  %v57 = vld [vmem:[%s2 + $0xd0] sm:$0xff]
  %v58 = vld [vmem:[%s2 + $0xd8] sm:$0xff]
  %v59 = vld [vmem:[%s2 + $0xe0] sm:$0xff]
  %v60 = vld [vmem:[%s2 + $0xe8] sm:$0xff]
  %v61 = vld [vmem:[%s2 + $0xf0] sm:$0xff]
  %v62 = vld [vmem:[%s2 + $0xf8] sm:$0xff]
  %v63 = vld [vmem:[%s2 + $0x100] sm:$0xff]
  %v64 = vld [vmem:[%s2 + $0x108] sm:$0xff]
  %v65 = vld [vmem:[%s2 + $0x110] sm:$0xff]
  %v66 = vld [vmem:[%s2 + $0x118] sm:$0xff]
  %v67 = vld [vmem:[%s2 + $0x120] sm:$0xff]
  %v68 = vld [vmem:[%s2 + $0x128] sm:$0xff]
  %v69 = vld [vmem:[%s2 + $0x130] sm:$0xff]
  %v70 = vld [vmem:[%s2 + $0x138] sm:$0xff]
  %v71 = vld [vmem:[%s2 + $0x140] sm:$0xff]
  %v72 = vld [vmem:[%s2 + $0x148] sm:$0xff]
  %v73 = vld [vmem:[%s2 + $0x150] sm:$0xff]
  %v74 = vld [vmem:[%s2 + $0x158] sm:$0xff]
  %v75 = vld [vmem:[%s2 + $0x160] sm:$0xff]
  %v76 = vld [vmem:[%s2 + $0x168] sm:$0xff]
  %v77 = vld [vmem:[%s2 + $0x170] sm:$0xff]
  %v78 = vld [vmem:[%s2 + $0x178] sm:$0xff]
  %v79 = vld [vmem:[%s2 + $0x180] sm:$0xff]
  %v80 = vld [vmem:[%s2 + $0x188] sm:$0xff]
  %v81 = vld [vmem:[%s2 + $0x190] sm:$0xff]
  %v82 = vld [vmem:[%s2 + $0x198] sm:$0xff]
  %v83 = vld [vmem:[%s2 + $0x1a0] sm:$0xff]
  %v84 = vld [vmem:[%s2 + $0x1a8] sm:$0xff]
  %v85 = vld [vmem:[%s2 + $0x1b0] sm:$0xff]
  %v86 = vld [vmem:[%s2 + $0x1b8] sm:$0xff]
  %v87 = vld [vmem:[%s2 + $0x1c0] sm:$0xff]
  %v88 = vld [vmem:[%s2 + $0x1c8] sm:$0xff]
  %v89 = vld [vmem:[%s2 + $0x1d0] sm:$0xff]
  %v90 = vld [vmem:[%s2 + $0x1d8] sm:$0xff]
  %v91 = vld [vmem:[%s2 + $0x1e0] sm:$0xff]
  %v92 = vld [vmem:[%s2 + $0x1e8] sm:$0xff]
  %v93 = vld [vmem:[%s2 + $0x1f0] sm:$0xff]
  %v94 = vld [vmem:[%s2 + $0x1f8] sm:$0xff]
  %v95 = vld [vmem:[%s2 + $0x200] sm:$0xff]
  %v96 = vld [vmem:[%s2 + $0x208] sm:$0xff]
  %v97 = vld [vmem:[%s2 + $0x210] sm:$0xff]
  %v98 = vld [vmem:[%s2 + $0x218] sm:$0xff]
  %v99 = vld [vmem:[%s2 + $0x220] sm:$0xff]
  %v100 = vld [vmem:[%s2 + $0x228] sm:$0xff]
  %v101 = vld [vmem:[%s2 + $0x230] sm:$0xff]
  %v102 = vld [vmem:[%s2 + $0x238] sm:$0xff]
  %v103 = vld [vmem:[%s2 + $0x240] sm:$0xff]
  %v104 = vld [vmem:[%s2 + $0x248] sm:$0xff]
  %v105 = vld [vmem:[%s2 + $0x250] sm:$0xff]
  %v106 = vld [vmem:[%s2 + $0x258] sm:$0xff]
  %v107 = vld [vmem:[%s2 + $0x260] sm:$0xff]
  %v108 = vld [vmem:[%s2 + $0x268] sm:$0xff]
  %v109 = vld [vmem:[%s2 + $0x270] sm:$0xff]
  %v110 = vld [vmem:[%s2 + $0x278] sm:$0xff]
  %v111 = vld [vmem:[%s2 + $0x280] sm:$0xff]
  %v112 = vld [vmem:[%s2 + $0x288] sm:$0xff]
  %v113 = vld [vmem:[%s2 + $0x290] sm:$0xff]
  %v114 = vld [vmem:[%s2 + $0x298] sm:$0xff]
  %v115 = vld [vmem:[%s2 + $0x2a0] sm:$0xff]
  %v116 = vld [vmem:[%s2 + $0x2a8] sm:$0xff]
  %v117 = vld [vmem:[%s2 + $0x2b0] sm:$0xff]
  %v118 = vld [vmem:[%s2 + $0x2b8] sm:$0xff]
  %v119 = vld [vmem:[%s2 + $0x2c0] sm:$0xff]
  %v120 = vld [vmem:[%s2 + $0x2c8] sm:$0xff]
  %v121 = vld [vmem:[%s2 + $0x2d0] sm:$0xff]
  %v122 = vld [vmem:[%s2 + $0x2d8] sm:$0xff]
  %v123 = vld [vmem:[%s2 + $0x2e0] sm:$0xff]
  %v124 = vld [vmem:[%s2 + $0x2e8] sm:$0xff]
  %v125 = vld [vmem:[%s2 + $0x2f0] sm:$0xff]
  %v126 = vld [vmem:[%s2 + $0x2f8] sm:$0xff]
  %v127 = vld [vmem:[%s3] sm:$0x1]
  %v129 = vlaneseq
  %v130 = vshrl.u32 %v129, 7
  %v131 = vsub.s32 0, %v130
  %v132 = vrot.slane %v127, %v131
  %134 = vmatprep.subr.mxu0 0.0
  %135 = vmatpush1.msra.mxu0 %v31
  %136 = vmatprep.subr.mxu0 0.0
  %137 = vmatpush1.msra.mxu0 %v32
  %138 = vmatprep.subr.mxu0 0.0
  %139 = vmatpush1.msra.mxu0 %v33
  %140 = vmatprep.subr.mxu0 0.0
  %141 = vmatpush1.msra.mxu0 %v34
  %142 = vmatprep.subr.mxu0 0.0
  %143 = vmatpush1.msra.mxu0 %v35
  %144 = vmatprep.subr.mxu0 0.0
  %145 = vmatpush1.msra.mxu0 %v36
  %146 = vmatprep.subr.mxu0 0.0
  %147 = vmatpush1.msra.mxu0 %v37
  %148 = vmatprep.subr.mxu0 0.0
  %149 = vmatpush1.msra.mxu0 %v38
  %150 = vmatprep.subr.mxu0 0.0
  %151 = vmatpush1.msra.mxu0 %v39
  %152 = vmatprep.subr.mxu0 0.0
  %153 = vmatpush1.msra.mxu0 %v40
  %154 = vmatprep.subr.mxu0 0.0
  %155 = vmatpush1.msra.mxu0 %v41
  %156 = vmatprep.subr.mxu0 0.0
  %157 = vmatpush1.msra.mxu0 %v42
  %158 = vmatprep.subr.mxu0 0.0
  %159 = vmatpush1.msra.mxu0 %v43
  %160 = vmatprep.subr.mxu0 0.0
  %161 = vmatpush1.msra.mxu0 %v44
  %162 = vmatprep.subr.mxu0 0.0
  %163 = vmatpush1.msra.mxu0 %v45
  %164 = vmatprep.subr.mxu0 0.0
  %165 = vmatpush1.msra.mxu0 %v46
  %166 = vmatprep.subr.mxu0 0.0
  %167 = vmatpush1.msra.mxu0 %v47
  %168 = vmatprep.subr.mxu0 0.0
  %169 = vmatpush1.msra.mxu0 %v48
  %170 = vmatprep.subr.mxu0 0.0
  %171 = vmatpush1.msra.mxu0 %v49
  %172 = vmatprep.subr.mxu0 0.0
  %173 = vmatpush1.msra.mxu0 %v50
  %174 = vmatprep.subr.mxu0 0.0
  %175 = vmatpush1.msra.mxu0 %v51
  %176 = vmatprep.subr.mxu0 0.0
  %177 = vmatpush1.msra.mxu0 %v52
  %178 = vmatprep.subr.mxu0 0.0
  %179 = vmatpush1.msra.mxu0 %v53
  %180 = vmatprep.subr.mxu0 0.0
  %181 = vmatpush1.msra.mxu0 %v54
  %182 = vmatprep.subr.mxu0 0.0
  %183 = vmatpush1.msra.mxu0 %v55
  %184 = vmatprep.subr.mxu0 0.0
  %185 = vmatpush1.msra.mxu0 %v56
  %186 = vmatprep.subr.mxu0 0.0
  %187 = vmatpush1.msra.mxu0 %v57
  %188 = vmatprep.subr.mxu0 0.0
  %189 = vmatpush1.msra.mxu0 %v58
  %190 = vmatprep.subr.mxu0 0.0
  %191 = vmatpush1.msra.mxu0 %v59
  %192 = vmatprep.subr.mxu0 0.0
  %193 = vmatpush1.msra.mxu0 %v60
  %194 = vmatprep.subr.mxu0 0.0
  %195 = vmatpush1.msra.mxu0 %v61
  %196 = vmatprep.subr.mxu0 0.0
  %197 = vmatpush1.msra.mxu0 %v62
  %198 = vmatprep.mubr.f32.mxu0 %v26
  %199 = vmatmul.mubr.f32.gmra.mrb[0].mxu0 %v25
  %v200 = vpop.f32.mrb[0].mxu0
  %v201 = vadd.f32 %v132, %v200
  %v202 = vpop.f32.mrb[0].mxu0
  %203 = vdwg.mxu0
  %204 = vmatprep.subr.mxu0 0.0
  %205 = vmatpush1.msra.mxu0 %v63
  %206 = vmatprep.subr.mxu0 0.0
  %207 = vmatpush1.msra.mxu0 %v64
  %208 = vmatprep.subr.mxu0 0.0
  %209 = vmatpush1.msra.mxu0 %v65
  %210 = vmatprep.subr.mxu0 0.0
  %211 = vmatpush1.msra.mxu0 %v66
  %212 = vmatprep.subr.mxu0 0.0
  %213 = vmatpush1.msra.mxu0 %v67
  %214 = vmatprep.subr.mxu0 0.0
  %215 = vmatpush1.msra.mxu0 %v68
  %216 = vmatprep.subr.mxu0 0.0
  %217 = vmatpush1.msra.mxu0 %v69
  %218 = vmatprep.subr.mxu0 0.0
  %219 = vmatpush1.msra.mxu0 %v70
  %220 = vmatprep.subr.mxu0 0.0
  %221 = vmatpush1.msra.mxu0 %v71
  %222 = vmatprep.subr.mxu0 0.0
  %223 = vmatpush1.msra.mxu0 %v72
  %224 = vmatprep.subr.mxu0 0.0
  %225 = vmatpush1.msra.mxu0 %v73
  %226 = vmatprep.subr.mxu0 0.0
  %227 = vmatpush1.msra.mxu0 %v74
  %228 = vmatprep.subr.mxu0 0.0
  %229 = vmatpush1.msra.mxu0 %v75
  %230 = vmatprep.subr.mxu0 0.0
  %231 = vmatpush1.msra.mxu0 %v76
  %232 = vmatprep.subr.mxu0 0.0
  %233 = vmatpush1.msra.mxu0 %v77
  %234 = vmatprep.subr.mxu0 0.0
  %235 = vmatpush1.msra.mxu0 %v78
  %236 = vmatprep.subr.mxu0 0.0
  %237 = vmatpush1.msra.mxu0 %v79
  %238 = vmatprep.subr.mxu0 0.0
  %239 = vmatpush1.msra.mxu0 %v80
  %240 = vmatprep.subr.mxu0 0.0
  %241 = vmatpush1.msra.mxu0 %v81
  %242 = vmatprep.subr.mxu0 0.0
  %243 = vmatpush1.msra.mxu0 %v82
  %244 = vmatprep.subr.mxu0 0.0
  %245 = vmatpush1.msra.mxu0 %v83
  %246 = vmatprep.subr.mxu0 0.0
  %247 = vmatpush1.msra.mxu0 %v84
  %248 = vmatprep.subr.mxu0 0.0
  %249 = vmatpush1.msra.mxu0 %v85
  %250 = vmatprep.subr.mxu0 0.0
  %251 = vmatpush1.msra.mxu0 %v86
  %252 = vmatprep.subr.mxu0 0.0
  %253 = vmatpush1.msra.mxu0 %v87
  %254 = vmatprep.subr.mxu0 0.0
  %255 = vmatpush1.msra.mxu0 %v88
  %256 = vmatprep.subr.mxu0 0.0
  %257 = vmatpush1.msra.mxu0 %v89
  %258 = vmatprep.subr.mxu0 0.0
  %259 = vmatpush1.msra.mxu0 %v90
  %260 = vmatprep.subr.mxu0 0.0
  %261 = vmatpush1.msra.mxu0 %v91
  %262 = vmatprep.subr.mxu0 0.0
  %263 = vmatpush1.msra.mxu0 %v92
  %264 = vmatprep.subr.mxu0 0.0
  %265 = vmatpush1.msra.mxu0 %v93
  %266 = vmatprep.subr.mxu0 0.0
  %267 = vmatpush1.msra.mxu0 %v94
  %268 = vmatprep.mubr.f32.mxu0 %v28
  %269 = vmatmul.mubr.f32.gmra.mrb[0].mxu0 %v27
  %v270 = vpop.f32.mrb[0].mxu0
  %v271 = vadd.f32 %v201, %v270
  %v272 = vpop.f32.mrb[0].mxu0
  %273 = vdwg.mxu0
  %274 = vmatprep.subr.mxu0 0.0
  %275 = vmatpush1.msra.mxu0 %v95
  %276 = vmatprep.subr.mxu0 0.0
  %277 = vmatpush1.msra.mxu0 %v96
  %278 = vmatprep.subr.mxu0 0.0
  %279 = vmatpush1.msra.mxu0 %v97
  %280 = vmatprep.subr.mxu0 0.0
  %281 = vmatpush1.msra.mxu0 %v98
  %282 = vmatprep.subr.mxu0 0.0
  %283 = vmatpush1.msra.mxu0 %v99
  %284 = vmatprep.subr.mxu0 0.0
  %285 = vmatpush1.msra.mxu0 %v100
  %286 = vmatprep.subr.mxu0 0.0
  %287 = vmatpush1.msra.mxu0 %v101
  %288 = vmatprep.subr.mxu0 0.0
  %289 = vmatpush1.msra.mxu0 %v102
  %290 = vmatprep.subr.mxu0 0.0
  %291 = vmatpush1.msra.mxu0 %v103
  %292 = vmatprep.subr.mxu0 0.0
  %293 = vmatpush1.msra.mxu0 %v104
  %294 = vmatprep.subr.mxu0 0.0
  %295 = vmatpush1.msra.mxu0 %v105
  %296 = vmatprep.subr.mxu0 0.0
  %297 = vmatpush1.msra.mxu0 %v106
  %298 = vmatprep.subr.mxu0 0.0
  %299 = vmatpush1.msra.mxu0 %v107
  %300 = vmatprep.subr.mxu0 0.0
  %301 = vmatpush1.msra.mxu0 %v108
  %302 = vmatprep.subr.mxu0 0.0
  %303 = vmatpush1.msra.mxu0 %v109
  %304 = vmatprep.subr.mxu0 0.0
  %305 = vmatpush1.msra.mxu0 %v110
  %306 = vmatprep.subr.mxu0 0.0
  %307 = vmatpush1.msra.mxu0 %v111
  %308 = vmatprep.subr.mxu0 0.0
  %309 = vmatpush1.msra.mxu0 %v112
  %310 = vmatprep.subr.mxu0 0.0
  %311 = vmatpush1.msra.mxu0 %v113
  %312 = vmatprep.subr.mxu0 0.0
  %313 = vmatpush1.msra.mxu0 %v114
  %314 = vmatprep.subr.mxu0 0.0
  %315 = vmatpush1.msra.mxu0 %v115
  %316 = vmatprep.subr.mxu0 0.0
  %317 = vmatpush1.msra.mxu0 %v116
  %318 = vmatprep.subr.mxu0 0.0
  %319 = vmatpush1.msra.mxu0 %v117
  %320 = vmatprep.subr.mxu0 0.0
  %321 = vmatpush1.msra.mxu0 %v118
  %322 = vmatprep.subr.mxu0 0.0
  %323 = vmatpush1.msra.mxu0 %v119
  %324 = vmatprep.subr.mxu0 0.0
  %325 = vmatpush1.msra.mxu0 %v120
  %326 = vmatprep.subr.mxu0 0.0
  %327 = vmatpush1.msra.mxu0 %v121
  %328 = vmatprep.subr.mxu0 0.0
  %329 = vmatpush1.msra.mxu0 %v122
  %330 = vmatprep.subr.mxu0 0.0
  %331 = vmatpush1.msra.mxu0 %v123
  %332 = vmatprep.subr.mxu0 0.0
  %333 = vmatpush1.msra.mxu0 %v124
  %334 = vmatprep.subr.mxu0 0.0
  %335 = vmatpush1.msra.mxu0 %v125
  %336 = vmatprep.subr.mxu0 0.0
  %337 = vmatpush1.msra.mxu0 %v126
  %338 = vmatprep.mubr.f32.mxu0 %v30
  %339 = vmatmul.mubr.f32.gmra.mrb[0].mxu0 %v29
  %v340 = vpop.f32.mrb[0].mxu0
  %v341 = vadd.f32 %v271, %v340
  %v342 = vpop.f32.mrb[0].mxu0
  %343 = vdwg.mxu0
  %v344 = vmul.f32 %v341, %v341
  %345 = vadd.xlane.f32.xlu0 %v344
  %v346 = vpop.xlane.xlu0 %345
  %v347 = vmax.f32 %v346, 1e-24
  %v348 = vrsqrt.pop %v347
  %v349 = vmul.f32 %v341, %v348
  %350 = vst [vmem:[%s6] sm:$0xff] %v349
  %v351 = vld [vmem:[%s1] sm:$0xff]
  %v352 = vld [vmem:[%s1 + $0x8] sm:$0xff]
  %v353 = vld [vmem:[%s1 + $0x10] sm:$0xff]
  %v354 = vld [vmem:[%s1 + $0x18] sm:$0xff]
  %v355 = vld [vmem:[%s1 + $0x20] sm:$0xff]
  %v356 = vld [vmem:[%s1 + $0x28] sm:$0xff]
  %v357 = vld [vmem:[%s4] sm:$0xff]
  %v358 = vld [vmem:[%s4 + $0x8] sm:$0xff]
  %v359 = vld [vmem:[%s4 + $0x10] sm:$0xff]
  %v360 = vld [vmem:[%s4 + $0x18] sm:$0xff]
  %v361 = vld [vmem:[%s4 + $0x20] sm:$0xff]
  %v362 = vld [vmem:[%s4 + $0x28] sm:$0xff]
  %v363 = vld [vmem:[%s4 + $0x30] sm:$0xff]
  %v364 = vld [vmem:[%s4 + $0x38] sm:$0xff]
  %v365 = vld [vmem:[%s4 + $0x40] sm:$0xff]
  %v366 = vld [vmem:[%s4 + $0x48] sm:$0xff]
  %v367 = vld [vmem:[%s4 + $0x50] sm:$0xff]
  %v368 = vld [vmem:[%s4 + $0x58] sm:$0xff]
  %v369 = vld [vmem:[%s4 + $0x60] sm:$0xff]
  %v370 = vld [vmem:[%s4 + $0x68] sm:$0xff]
  %v371 = vld [vmem:[%s4 + $0x70] sm:$0xff]
  %v372 = vld [vmem:[%s4 + $0x78] sm:$0xff]
  %v373 = vld [vmem:[%s4 + $0x80] sm:$0xff]
  %v374 = vld [vmem:[%s4 + $0x88] sm:$0xff]
  %v375 = vld [vmem:[%s4 + $0x90] sm:$0xff]
  %v376 = vld [vmem:[%s4 + $0x98] sm:$0xff]
  %v377 = vld [vmem:[%s4 + $0xa0] sm:$0xff]
  %v378 = vld [vmem:[%s4 + $0xa8] sm:$0xff]
  %v379 = vld [vmem:[%s4 + $0xb0] sm:$0xff]
  %v380 = vld [vmem:[%s4 + $0xb8] sm:$0xff]
  %v381 = vld [vmem:[%s4 + $0xc0] sm:$0xff]
  %v382 = vld [vmem:[%s4 + $0xc8] sm:$0xff]
  %v383 = vld [vmem:[%s4 + $0xd0] sm:$0xff]
  %v384 = vld [vmem:[%s4 + $0xd8] sm:$0xff]
  %v385 = vld [vmem:[%s4 + $0xe0] sm:$0xff]
  %v386 = vld [vmem:[%s4 + $0xe8] sm:$0xff]
  %v387 = vld [vmem:[%s4 + $0xf0] sm:$0xff]
  %v388 = vld [vmem:[%s4 + $0xf8] sm:$0xff]
  %v389 = vld [vmem:[%s4 + $0x100] sm:$0xff]
  %v390 = vld [vmem:[%s4 + $0x108] sm:$0xff]
  %v391 = vld [vmem:[%s4 + $0x110] sm:$0xff]
  %v392 = vld [vmem:[%s4 + $0x118] sm:$0xff]
  %v393 = vld [vmem:[%s4 + $0x120] sm:$0xff]
  %v394 = vld [vmem:[%s4 + $0x128] sm:$0xff]
  %v395 = vld [vmem:[%s4 + $0x130] sm:$0xff]
  %v396 = vld [vmem:[%s4 + $0x138] sm:$0xff]
  %v397 = vld [vmem:[%s4 + $0x140] sm:$0xff]
  %v398 = vld [vmem:[%s4 + $0x148] sm:$0xff]
  %v399 = vld [vmem:[%s4 + $0x150] sm:$0xff]
  %v400 = vld [vmem:[%s4 + $0x158] sm:$0xff]
  %v401 = vld [vmem:[%s4 + $0x160] sm:$0xff]
  %v402 = vld [vmem:[%s4 + $0x168] sm:$0xff]
  %v403 = vld [vmem:[%s4 + $0x170] sm:$0xff]
  %v404 = vld [vmem:[%s4 + $0x178] sm:$0xff]
  %v405 = vld [vmem:[%s4 + $0x180] sm:$0xff]
  %v406 = vld [vmem:[%s4 + $0x188] sm:$0xff]
  %v407 = vld [vmem:[%s4 + $0x190] sm:$0xff]
  %v408 = vld [vmem:[%s4 + $0x198] sm:$0xff]
  %v409 = vld [vmem:[%s4 + $0x1a0] sm:$0xff]
  %v410 = vld [vmem:[%s4 + $0x1a8] sm:$0xff]
  %v411 = vld [vmem:[%s4 + $0x1b0] sm:$0xff]
  %v412 = vld [vmem:[%s4 + $0x1b8] sm:$0xff]
  %v413 = vld [vmem:[%s4 + $0x1c0] sm:$0xff]
  %v414 = vld [vmem:[%s4 + $0x1c8] sm:$0xff]
  %v415 = vld [vmem:[%s4 + $0x1d0] sm:$0xff]
  %v416 = vld [vmem:[%s4 + $0x1d8] sm:$0xff]
  %v417 = vld [vmem:[%s4 + $0x1e0] sm:$0xff]
  %v418 = vld [vmem:[%s4 + $0x1e8] sm:$0xff]
  %v419 = vld [vmem:[%s4 + $0x1f0] sm:$0xff]
  %v420 = vld [vmem:[%s4 + $0x1f8] sm:$0xff]
  %v421 = vld [vmem:[%s4 + $0x200] sm:$0xff]
  %v422 = vld [vmem:[%s4 + $0x208] sm:$0xff]
  %v423 = vld [vmem:[%s4 + $0x210] sm:$0xff]
  %v424 = vld [vmem:[%s4 + $0x218] sm:$0xff]
  %v425 = vld [vmem:[%s4 + $0x220] sm:$0xff]
  %v426 = vld [vmem:[%s4 + $0x228] sm:$0xff]
  %v427 = vld [vmem:[%s4 + $0x230] sm:$0xff]
  %v428 = vld [vmem:[%s4 + $0x238] sm:$0xff]
  %v429 = vld [vmem:[%s4 + $0x240] sm:$0xff]
  %v430 = vld [vmem:[%s4 + $0x248] sm:$0xff]
  %v431 = vld [vmem:[%s4 + $0x250] sm:$0xff]
  %v432 = vld [vmem:[%s4 + $0x258] sm:$0xff]
  %v433 = vld [vmem:[%s4 + $0x260] sm:$0xff]
  %v434 = vld [vmem:[%s4 + $0x268] sm:$0xff]
  %v435 = vld [vmem:[%s4 + $0x270] sm:$0xff]
  %v436 = vld [vmem:[%s4 + $0x278] sm:$0xff]
  %v437 = vld [vmem:[%s4 + $0x280] sm:$0xff]
  %v438 = vld [vmem:[%s4 + $0x288] sm:$0xff]
  %v439 = vld [vmem:[%s4 + $0x290] sm:$0xff]
  %v440 = vld [vmem:[%s4 + $0x298] sm:$0xff]
  %v441 = vld [vmem:[%s4 + $0x2a0] sm:$0xff]
  %v442 = vld [vmem:[%s4 + $0x2a8] sm:$0xff]
  %v443 = vld [vmem:[%s4 + $0x2b0] sm:$0xff]
  %v444 = vld [vmem:[%s4 + $0x2b8] sm:$0xff]
  %v445 = vld [vmem:[%s4 + $0x2c0] sm:$0xff]
  %v446 = vld [vmem:[%s4 + $0x2c8] sm:$0xff]
  %v447 = vld [vmem:[%s4 + $0x2d0] sm:$0xff]
  %v448 = vld [vmem:[%s4 + $0x2d8] sm:$0xff]
  %v449 = vld [vmem:[%s4 + $0x2e0] sm:$0xff]
  %v450 = vld [vmem:[%s4 + $0x2e8] sm:$0xff]
  %v451 = vld [vmem:[%s4 + $0x2f0] sm:$0xff]
  %v452 = vld [vmem:[%s4 + $0x2f8] sm:$0xff]
  %v453 = vld [vmem:[%s5] sm:$0x1]
  %v455 = vlaneseq
  %v456 = vshrl.u32 %v455, 7
  %v457 = vsub.s32 0, %v456
  %v458 = vrot.slane %v453, %v457
  %460 = vmatprep.subr.mxu0 0.0
  %461 = vmatpush1.msra.mxu0 %v357
  %462 = vmatprep.subr.mxu0 0.0
  %463 = vmatpush1.msra.mxu0 %v358
  %464 = vmatprep.subr.mxu0 0.0
  %465 = vmatpush1.msra.mxu0 %v359
  %466 = vmatprep.subr.mxu0 0.0
  %467 = vmatpush1.msra.mxu0 %v360
  %468 = vmatprep.subr.mxu0 0.0
  %469 = vmatpush1.msra.mxu0 %v361
  %470 = vmatprep.subr.mxu0 0.0
  %471 = vmatpush1.msra.mxu0 %v362
  %472 = vmatprep.subr.mxu0 0.0
  %473 = vmatpush1.msra.mxu0 %v363
  %474 = vmatprep.subr.mxu0 0.0
  %475 = vmatpush1.msra.mxu0 %v364
  %476 = vmatprep.subr.mxu0 0.0
  %477 = vmatpush1.msra.mxu0 %v365
  %478 = vmatprep.subr.mxu0 0.0
  %479 = vmatpush1.msra.mxu0 %v366
  %480 = vmatprep.subr.mxu0 0.0
  %481 = vmatpush1.msra.mxu0 %v367
  %482 = vmatprep.subr.mxu0 0.0
  %483 = vmatpush1.msra.mxu0 %v368
  %484 = vmatprep.subr.mxu0 0.0
  %485 = vmatpush1.msra.mxu0 %v369
  %486 = vmatprep.subr.mxu0 0.0
  %487 = vmatpush1.msra.mxu0 %v370
  %488 = vmatprep.subr.mxu0 0.0
  %489 = vmatpush1.msra.mxu0 %v371
  %490 = vmatprep.subr.mxu0 0.0
  %491 = vmatpush1.msra.mxu0 %v372
  %492 = vmatprep.subr.mxu0 0.0
  %493 = vmatpush1.msra.mxu0 %v373
  %494 = vmatprep.subr.mxu0 0.0
  %495 = vmatpush1.msra.mxu0 %v374
  %496 = vmatprep.subr.mxu0 0.0
  %497 = vmatpush1.msra.mxu0 %v375
  %498 = vmatprep.subr.mxu0 0.0
  %499 = vmatpush1.msra.mxu0 %v376
  %500 = vmatprep.subr.mxu0 0.0
  %501 = vmatpush1.msra.mxu0 %v377
  %502 = vmatprep.subr.mxu0 0.0
  %503 = vmatpush1.msra.mxu0 %v378
  %504 = vmatprep.subr.mxu0 0.0
  %505 = vmatpush1.msra.mxu0 %v379
  %506 = vmatprep.subr.mxu0 0.0
  %507 = vmatpush1.msra.mxu0 %v380
  %508 = vmatprep.subr.mxu0 0.0
  %509 = vmatpush1.msra.mxu0 %v381
  %510 = vmatprep.subr.mxu0 0.0
  %511 = vmatpush1.msra.mxu0 %v382
  %512 = vmatprep.subr.mxu0 0.0
  %513 = vmatpush1.msra.mxu0 %v383
  %514 = vmatprep.subr.mxu0 0.0
  %515 = vmatpush1.msra.mxu0 %v384
  %516 = vmatprep.subr.mxu0 0.0
  %517 = vmatpush1.msra.mxu0 %v385
  %518 = vmatprep.subr.mxu0 0.0
  %519 = vmatpush1.msra.mxu0 %v386
  %520 = vmatprep.subr.mxu0 0.0
  %521 = vmatpush1.msra.mxu0 %v387
  %522 = vmatprep.subr.mxu0 0.0
  %523 = vmatpush1.msra.mxu0 %v388
  %524 = vmatprep.mubr.f32.mxu0 %v352
  %525 = vmatmul.mubr.f32.gmra.mrb[0].mxu0 %v351
  %v526 = vpop.f32.mrb[0].mxu0
  %v527 = vadd.f32 %v458, %v526
  %v528 = vpop.f32.mrb[0].mxu0
  %529 = vdwg.mxu0
  %530 = vmatprep.subr.mxu0 0.0
  %531 = vmatpush1.msra.mxu0 %v389
  %532 = vmatprep.subr.mxu0 0.0
  %533 = vmatpush1.msra.mxu0 %v390
  %534 = vmatprep.subr.mxu0 0.0
  %535 = vmatpush1.msra.mxu0 %v391
  %536 = vmatprep.subr.mxu0 0.0
  %537 = vmatpush1.msra.mxu0 %v392
  %538 = vmatprep.subr.mxu0 0.0
  %539 = vmatpush1.msra.mxu0 %v393
  %540 = vmatprep.subr.mxu0 0.0
  %541 = vmatpush1.msra.mxu0 %v394
  %542 = vmatprep.subr.mxu0 0.0
  %543 = vmatpush1.msra.mxu0 %v395
  %544 = vmatprep.subr.mxu0 0.0
  %545 = vmatpush1.msra.mxu0 %v396
  %546 = vmatprep.subr.mxu0 0.0
  %547 = vmatpush1.msra.mxu0 %v397
  %548 = vmatprep.subr.mxu0 0.0
  %549 = vmatpush1.msra.mxu0 %v398
  %550 = vmatprep.subr.mxu0 0.0
  %551 = vmatpush1.msra.mxu0 %v399
  %552 = vmatprep.subr.mxu0 0.0
  %553 = vmatpush1.msra.mxu0 %v400
  %554 = vmatprep.subr.mxu0 0.0
  %555 = vmatpush1.msra.mxu0 %v401
  %556 = vmatprep.subr.mxu0 0.0
  %557 = vmatpush1.msra.mxu0 %v402
  %558 = vmatprep.subr.mxu0 0.0
  %559 = vmatpush1.msra.mxu0 %v403
  %560 = vmatprep.subr.mxu0 0.0
  %561 = vmatpush1.msra.mxu0 %v404
  %562 = vmatprep.subr.mxu0 0.0
  %563 = vmatpush1.msra.mxu0 %v405
  %564 = vmatprep.subr.mxu0 0.0
  %565 = vmatpush1.msra.mxu0 %v406
  %566 = vmatprep.subr.mxu0 0.0
  %567 = vmatpush1.msra.mxu0 %v407
  %568 = vmatprep.subr.mxu0 0.0
  %569 = vmatpush1.msra.mxu0 %v408
  %570 = vmatprep.subr.mxu0 0.0
  %571 = vmatpush1.msra.mxu0 %v409
  %572 = vmatprep.subr.mxu0 0.0
  %573 = vmatpush1.msra.mxu0 %v410
  %574 = vmatprep.subr.mxu0 0.0
  %575 = vmatpush1.msra.mxu0 %v411
  %576 = vmatprep.subr.mxu0 0.0
  %577 = vmatpush1.msra.mxu0 %v412
  %578 = vmatprep.subr.mxu0 0.0
  %579 = vmatpush1.msra.mxu0 %v413
  %580 = vmatprep.subr.mxu0 0.0
  %581 = vmatpush1.msra.mxu0 %v414
  %582 = vmatprep.subr.mxu0 0.0
  %583 = vmatpush1.msra.mxu0 %v415
  %584 = vmatprep.subr.mxu0 0.0
  %585 = vmatpush1.msra.mxu0 %v416
  %586 = vmatprep.subr.mxu0 0.0
  %587 = vmatpush1.msra.mxu0 %v417
  %588 = vmatprep.subr.mxu0 0.0
  %589 = vmatpush1.msra.mxu0 %v418
  %590 = vmatprep.subr.mxu0 0.0
  %591 = vmatpush1.msra.mxu0 %v419
  %592 = vmatprep.subr.mxu0 0.0
  %593 = vmatpush1.msra.mxu0 %v420
  %594 = vmatprep.mubr.f32.mxu0 %v354
  %595 = vmatmul.mubr.f32.gmra.mrb[0].mxu0 %v353
  %v596 = vpop.f32.mrb[0].mxu0
  %v597 = vadd.f32 %v527, %v596
  %v598 = vpop.f32.mrb[0].mxu0
  %599 = vdwg.mxu0
  %600 = vmatprep.subr.mxu0 0.0
  %601 = vmatpush1.msra.mxu0 %v421
  %602 = vmatprep.subr.mxu0 0.0
  %603 = vmatpush1.msra.mxu0 %v422
  %604 = vmatprep.subr.mxu0 0.0
  %605 = vmatpush1.msra.mxu0 %v423
  %606 = vmatprep.subr.mxu0 0.0
  %607 = vmatpush1.msra.mxu0 %v424
  %608 = vmatprep.subr.mxu0 0.0
  %609 = vmatpush1.msra.mxu0 %v425
  %610 = vmatprep.subr.mxu0 0.0
  %611 = vmatpush1.msra.mxu0 %v426
  %612 = vmatprep.subr.mxu0 0.0
  %613 = vmatpush1.msra.mxu0 %v427
  %614 = vmatprep.subr.mxu0 0.0
  %615 = vmatpush1.msra.mxu0 %v428
  %616 = vmatprep.subr.mxu0 0.0
  %617 = vmatpush1.msra.mxu0 %v429
  %618 = vmatprep.subr.mxu0 0.0
  %619 = vmatpush1.msra.mxu0 %v430
  %620 = vmatprep.subr.mxu0 0.0
  %621 = vmatpush1.msra.mxu0 %v431
  %622 = vmatprep.subr.mxu0 0.0
  %623 = vmatpush1.msra.mxu0 %v432
  %624 = vmatprep.subr.mxu0 0.0
  %625 = vmatpush1.msra.mxu0 %v433
  %626 = vmatprep.subr.mxu0 0.0
  %627 = vmatpush1.msra.mxu0 %v434
  %628 = vmatprep.subr.mxu0 0.0
  %629 = vmatpush1.msra.mxu0 %v435
  %630 = vmatprep.subr.mxu0 0.0
  %631 = vmatpush1.msra.mxu0 %v436
  %632 = vmatprep.subr.mxu0 0.0
  %633 = vmatpush1.msra.mxu0 %v437
  %634 = vmatprep.subr.mxu0 0.0
  %635 = vmatpush1.msra.mxu0 %v438
  %636 = vmatprep.subr.mxu0 0.0
  %637 = vmatpush1.msra.mxu0 %v439
  %638 = vmatprep.subr.mxu0 0.0
  %639 = vmatpush1.msra.mxu0 %v440
  %640 = vmatprep.subr.mxu0 0.0
  %641 = vmatpush1.msra.mxu0 %v441
  %642 = vmatprep.subr.mxu0 0.0
  %643 = vmatpush1.msra.mxu0 %v442
  %644 = vmatprep.subr.mxu0 0.0
  %645 = vmatpush1.msra.mxu0 %v443
  %646 = vmatprep.subr.mxu0 0.0
  %647 = vmatpush1.msra.mxu0 %v444
  %648 = vmatprep.subr.mxu0 0.0
  %649 = vmatpush1.msra.mxu0 %v445
  %650 = vmatprep.subr.mxu0 0.0
  %651 = vmatpush1.msra.mxu0 %v446
  %652 = vmatprep.subr.mxu0 0.0
  %653 = vmatpush1.msra.mxu0 %v447
  %654 = vmatprep.subr.mxu0 0.0
  %655 = vmatpush1.msra.mxu0 %v448
  %656 = vmatprep.subr.mxu0 0.0
  %657 = vmatpush1.msra.mxu0 %v449
  %658 = vmatprep.subr.mxu0 0.0
  %659 = vmatpush1.msra.mxu0 %v450
  %660 = vmatprep.subr.mxu0 0.0
  %661 = vmatpush1.msra.mxu0 %v451
  %662 = vmatprep.subr.mxu0 0.0
  %663 = vmatpush1.msra.mxu0 %v452
  %664 = vmatprep.mubr.f32.mxu0 %v356
  %665 = vmatmul.mubr.f32.gmra.mrb[0].mxu0 %v355
  %v666 = vpop.f32.mrb[0].mxu0
  %v667 = vadd.f32 %v597, %v666
  %v668 = vpop.f32.mrb[0].mxu0
  %669 = vdwg.mxu0
  %v670 = vmul.f32 %v667, %v667
  %671 = vadd.xlane.f32.xlu0 %v670
  %v672 = vpop.xlane.xlu0 %671
  %v673 = vmax.f32 %v672, 1e-24
  %v674 = vrsqrt.pop %v673
  %v675 = vmul.f32 %v667, %v674
  %676 = vst [vmem:[%s7] sm:$0xff] %v675
  // Predicated region
  $region26: #{moco_forward.2} parent=0 // pred_check
    _
  $region27: #{moco_forward.2} parent=0 // pred_check_branch
    %678 = sbr.rel (0) target = $region29
  $region28: #{moco_forward.2} parent=0 // pred_region
    _
  $region29: #{moco_forward.2} parent=0 // pred_fallthru
    _
  // Predicated region
  $region30: #{moco_forward.2} parent=0 // pred_check
    _
  $region31: #{moco_forward.2} parent=0 // pred_check_branch
    %680 = sbr.rel (0) target = $region33
  $region32: #{moco_forward.2} parent=0 // pred_region
    _
  $region33: #{moco_forward.2} parent=0 // pred_fallthru
    _
  // Predicated region
  $region34: #{moco_forward.2} parent=0 // pred_check
    _
  $region35: #{moco_forward.2} parent=0 // pred_check_branch
    %682 = sbr.rel (0) target = $region37
  $region36: #{moco_forward.2} parent=0 // pred_region
    _
  $region37: #{moco_forward.2} parent=0 // pred_fallthru
    _
  // Predicated region
  $region38: #{moco_forward.2} parent=0 // pred_check
    _
  $region39: #{moco_forward.2} parent=0 // pred_check_branch
    %684 = sbr.rel (0) target = $region41
  $region40: #{moco_forward.2} parent=0 // pred_region
    _
  $region41: #{moco_forward.2} parent=0 // pred_fallthru
    _

</llo_original>
